<compile_context>
chip_gen: v6e
topology: v6e:2x2x1
jax: 0.10.0
libtpu: 0.0.40
codegen_flags: <defaults>
</compile_context>

<pallas_src>
import functools

import jax
import jax.numpy as jnp
from jax.experimental import pallas as pl
from jax.experimental.pallas import tpu as pltpu


# ----------------------------------------------------------------------------
# Identity (the `network.fc = Identity()` replacement inside Encoder)
# ----------------------------------------------------------------------------
def identity(x: jax.Array) -> jax.Array:
    """Identity forward pass. Zero cost: no kernel, no HBM round-trip."""
    return x


def _dma_copy_kernel(x_hbm_ref, o_hbm_ref, sem):
    # Single DMA descriptor: the DMA engine streams HBM->HBM at roofline with
    # no TensorCore involvement and no VMEM round-trip.
    cp = pltpu.make_async_copy(x_hbm_ref, o_hbm_ref, sem)
    cp.start()
    cp.wait()


def identity_copy(x: jax.Array) -> jax.Array:
    """Identity that materializes a distinct output buffer.

    Implemented as one direct HBM->HBM async DMA: both refs stay in
    memory_space=pl.ANY, there is no grid and zero VMEM footprint, so the
    kernel is generation-agnostic (v5e / v6e / v7x) and handles any
    shape/dtype.  (For a standalone copy with no adjacent Pallas work,
    `jnp.copy(x)` is equally good — keep this for Pallas-adjacent call sites.)
    """
    nbytes = x.size * jnp.dtype(x.dtype).itemsize
    return pl.pallas_call(
        _dma_copy_kernel,
        out_shape=jax.ShapeDtypeStruct(x.shape, x.dtype),
        in_specs=[pl.BlockSpec(memory_space=pl.ANY)],
        out_specs=pl.BlockSpec(memory_space=pl.ANY),
        scratch_shapes=[pltpu.SemaphoreType.DMA(())],
        cost_estimate=pl.CostEstimate(
            flops=0, transcendentals=0, bytes_accessed=2 * nbytes),
    )(x)


# ----------------------------------------------------------------------------
# bnet / unet heads: Linear -> ReLU -> Linear -> ReLU (+ the Encoder's
# `.relu_()` on the backbone features), fused into one kernel per head.
# ----------------------------------------------------------------------------
def _mlp_head_kernel(x_ref, w1_ref, b1_ref, w2_ref, b2_ref, o_ref, *,
                     apply_input_relu: bool):
    x = x_ref[...].astype(jnp.float32)
    if apply_input_relu:                      # Encoder: x = network(x).relu_()
        x = jnp.maximum(x, 0.0)
    h = jnp.dot(x, w1_ref[...].astype(jnp.float32),
                preferred_element_type=jnp.float32)
    h = jnp.maximum(h + b1_ref[...].astype(jnp.float32), 0.0)
    y = jnp.dot(h, w2_ref[...].astype(jnp.float32),
                preferred_element_type=jnp.float32)
    y = jnp.maximum(y + b2_ref[...].astype(jnp.float32), 0.0)
    o_ref[...] = y.astype(o_ref.dtype)


def mlp_head(x, w1, b1, w2, b2, *, apply_input_relu=True):
    """relu(relu([relu(x)] @ w1 + b1) @ w2 + b2) as one whole-array block."""
    n, f = x.shape
    c = w1.shape[1]
    itemsize = jnp.dtype(x.dtype).itemsize
    bytes_accessed = itemsize * (x.size + w1.size + b1.size + w2.size
                                 + b2.size + n * c)
    return pl.pallas_call(
        functools.partial(_mlp_head_kernel, apply_input_relu=apply_input_relu),
        out_shape=jax.ShapeDtypeStruct((n, c), x.dtype),
        cost_estimate=pl.CostEstimate(
            flops=2 * n * f * c + 2 * n * c * c,
            transcendentals=0,
            bytes_accessed=bytes_accessed),
    )(x, w1, b1, w2, b2)


# ----------------------------------------------------------------------------
# Encoder.forward (from the point where backbone features exist)
# ----------------------------------------------------------------------------
def encoder_forward(bfeatures, ufeatures, bnet_params, unet_params):
    """PyTorch: x = cat([b, u]); x = network(x).relu_();
                return bnet(x[:len(b)]), unet(x[len(b):])
    """
    # TODO(synk): the torchvision pretrained conv trunk has no in-script Pallas
    # equivalent; this function consumes its output features directly (the
    # fc=Identity head is the zero-cost identity() passthrough).
    nb = bfeatures.shape[0]
    feats = jnp.concatenate([identity(bfeatures), identity(ufeatures)], axis=0)
    b_out = mlp_head(feats[:nb], *bnet_params, apply_input_relu=True)
    u_out = mlp_head(feats[nb:], *unet_params, apply_input_relu=True)
    return b_out, u_out


if __name__ == "__main__":
    key = jax.random.PRNGKey(0)
    (k_img, k_odd, k_big, k_feat_b, k_feat_u,
     k_bparams, k_uparams) = jax.random.split(key, 7)

    # ---- Identity / identity_copy ------------------------------------------
    x = jax.random.normal(k_img, (2, 4, 16, 16), dtype=jnp.float32)

    y_free = identity(x)                      # zero-cost path used by Encoder
    assert y_free is x

    y = identity_copy(x)                      # direct HBM->HBM DMA path
    jax.block_until_ready(y)
    assert y.shape == x.shape and y.dtype == x.dtype
    assert bool(jnp.array_equal(y, x))

    # Non-multiple-of-128 element count: same DMA path, no VMEM hazard.
    x_odd = jax.random.normal(k_odd, (3, 5, 7), dtype=jnp.float32)
    y_odd = identity_copy(x_odd)
    jax.block_until_ready(y_odd)
    assert bool(jnp.array_equal(y_odd, x_odd))

    # Large tensor (16 MiB f32): still a single DMA, VMEM-budget independent.
    x_big = jax.random.normal(k_big, (4, 4, 512, 512), dtype=jnp.float32)
    y_big = identity_copy(x_big)
    jax.block_until_ready(y_big)
    assert bool(jnp.array_equal(y_big, x_big))

    # ---- Encoder heads (bnet / unet) ---------------------------------------
    nb = nu = 2            # batch per stream
    in_features = 32       # backbone feature width (small test size)
    num_channels = 4

    bfeat = jax.random.normal(k_feat_b, (nb, in_features), dtype=jnp.float32)
    ufeat = jax.random.normal(k_feat_u, (nu, in_features), dtype=jnp.float32)

    def make_head_params(k):
        ka, kb = jax.random.split(k)
        w1 = jax.random.normal(ka, (in_features, num_channels), jnp.float32) * 0.1
        b1 = jnp.full((1, num_channels), 0.01, jnp.float32)
        w2 = jax.random.normal(kb, (num_channels, num_channels), jnp.float32) * 0.1
        b2 = jnp.full((1, num_channels), 0.01, jnp.float32)
        return (w1, b1, w2, b2)

    bnet_params = make_head_params(k_bparams)
    unet_params = make_head_params(k_uparams)

    b_out, u_out = encoder_forward(bfeat, ufeat, bnet_params, unet_params)
    jax.block_until_ready((b_out, u_out))
    assert b_out.shape == (nb, num_channels)
    assert u_out.shape == (nu, num_channels)

    # Pure-JAX reference for the head math.
    def ref_head(xf, w1, b1, w2, b2):
        xf = jnp.maximum(xf, 0.0)
        h = jnp.maximum(xf @ w1 + b1, 0.0)
        return jnp.maximum(h @ w2 + b2, 0.0)

    assert bool(jnp.allclose(b_out, ref_head(bfeat, *bnet_params),
                             atol=1e-5, rtol=1e-5))
    assert bool(jnp.allclose(u_out, ref_head(ufeat, *unet_params),
                             atol=1e-5, rtol=1e-5))

    print("KERNEL_OK")
</pallas_src>

<mosaic_0001>
module attributes {stable_mosaic.version = 11 : i64} {
  func.func @_dma_copy_kernel(%arg0: memref<2x4x16x16xf32, #tpu.memory_space<any>>, %arg1: memref<2x4x16x16xf32, #tpu.memory_space<any>>, %arg2: memref<!tpu.dma_semaphore, #tpu.memory_space<semaphore_mem>>) attributes {dimension_semantics = [], scalar_prefetch = 0 : i64, scratch_operands = 1 : i64, tpu.core_type = #tpu.core_type<tc>} {
    tpu.enqueue_dma source(%arg0 : memref<2x4x16x16xf32, #tpu.memory_space<any>>) target(%arg1 : memref<2x4x16x16xf32, #tpu.memory_space<any>>) target_semaphore(%arg2 : memref<!tpu.dma_semaphore, #tpu.memory_space<semaphore_mem>>)
    tpu.wait_dma2 semaphore(%arg2 : memref<!tpu.dma_semaphore, #tpu.memory_space<semaphore_mem>>) src(%arg0 : memref<2x4x16x16xf32, #tpu.memory_space<any>>) dst(%arg1 : memref<2x4x16x16xf32, #tpu.memory_space<any>>)
    return
  }
}

</mosaic_0001>

<llo_original>
// kernel: tpu_custom_call.1
$region0: #{tpu_custom_call.1}
  #allocation0 [shape = 'u32[]', space=smem, size = 0x4, offset = 0x4, fixed_abs, tag = 'smem constant byte address 0x4 - core index']
  #allocation1 [shape = 'u32[144,128]{1,0:T(1,128)}', space=vmem, size = 0x12000, scoped, tag = 'internal scratch']
  #allocation2 [shape = 's32[1]{0}', space=sflag, size = 0x4, scoped, tag = 'scratch operand']
  #allocation3 [shape = 's32[]', space=sflag, size = 0x4, offset = 0, fixed_abs, tag = 'sflag constant byte address 0x0 - dummy sync flag']
  #allocation4 [shape = 'u32[0]{0}', space=smem, size = 0, offset = 0, fixed_abs, tag = 'smem constant byte address 0x0 - null']
  %s0 = inlined_call_operand.hbm [shape: f32[2,4,16,16], index: 0, kind: input, shape index: {}]
  %s1 = inlined_call_operand.hbm [shape: f32[2,4,16,16], index: 1, kind: output, shape index: {}]
  %s2 = sld [smem:[#allocation0]]
  $region2: #{tpu_custom_call.1} parent=0
    _
  %s4 = ssub.s32 1, %s2
  %s5 = scalar_select 0, %s4, %s2
  %s7 = sshll.u32 1, 14
  %s8 = sxor.u32 4294967295, %s7
  %12 = dma.general %s0, 2048, %s1, [#allocation2], 131072, [#allocation4], 0, 0
  %s13 = smul.u32 2, 4
  %s14 = smul.u32 %s13, 16
  %s15 = smul.u32 %s14, 1
  %s16 = sshll.u32 %s15, 4
  %17 = dma.done [#allocation2], %s16
  %18 = vsyncmov [#allocation2]
  %s19 = vpop.sfrf %18
  %p20 = scmp.eq.s32.totalorder %s19, 0
  %p21 = pneg %p20
  %23 = shalt.err (%p21)

</llo_original>
